<compile_context>
chip_gen: v6e
topology: v6e:2x2x1
jax: 0.10.0
libtpu: 0.0.40
codegen_flags: <defaults>
</compile_context>

<pallas_src>
import functools

import jax
import jax.numpy as jnp
from jax.experimental import pallas as pl
from jax.experimental.pallas import tpu as pltpu


# ----------------------------------------------------------------------------
# Fused per-layer kernel: block-level input projection + sequential recurrence.
# Grid: one axis over time blocks ("arbitrary": h/c carried in VMEM scratch).
# ----------------------------------------------------------------------------
def _lstm_block_kernel(x_ref, h0_ref, c0_ref, w_ih_ref, w_hh_ref, b_ref,
                       y_ref, h_sc, c_sc, gx_sc,
                       *, hidden, batch, block_t, apply_sigmoid):
    """One time-block of a fused LSTM layer.

    x_ref:     (block_t*batch, in_dim) f32   time-major 2-D slab of layer input
    h0_ref:    (batch, H) f32                initial hidden state (read at block 0)
    c0_ref:    (batch, H) f32                initial cell state   (read at block 0)
    w_ih_ref:  (in_dim, 4H) bf16             input weights, gate order [i, f, o, g]
    w_hh_ref:  (H, 4H) bf16                  recurrent weights, gate order [i, f, o, g]
    b_ref:     (1, 4H) f32                   b_ih + b_hh, gate order [i, f, o, g]
    y_ref:     (block_t*batch, H) f32        per-timestep hidden output (2-D slab)
    h_sc/c_sc: (batch, H) f32 VMEM scratch carried across time blocks
    gx_sc:     (block_t*batch, 4H) f32 VMEM scratch for the block's input projection
    """
    H = hidden

    @pl.when(pl.program_id(0) == 0)
    def _():
        h_sc[...] = h0_ref[...]
        c_sc[...] = c0_ref[...]

    # Block-level input projection (one MXU matmul per block, bf16 operands,
    # f32 accumulation) -- sits off the per-timestep serial chain.
    gx_sc[...] = (jnp.dot(x_ref[...].astype(jnp.bfloat16), w_ih_ref[...],
                          preferred_element_type=jnp.float32)
                  + b_ref[...])

    w_hh = w_hh_ref[...]          # bf16; loaded once per block, reused by every step
    h = h_sc[...]
    c = c_sc[...]

    # Static unrolled time loop: every gx_sc / y_ref slice below has a static start,
    # and only h/c are live across iterations (gx / y accesses are ref-mediated).
    # TODO(synk): at large block_t switch to lax.fori_loop(..., unroll=4).
    for t in range(block_t):
        gx_t = gx_sc[pl.ds(t * batch, batch), :]
        gates = gx_t + jnp.dot(h.astype(jnp.bfloat16), w_hh,
                               preferred_element_type=jnp.float32)
        # Gate order [i, f, o, g]: one sigmoid over the contiguous 3H prefix,
        # one tanh over the trailing H.
        sig = jax.nn.sigmoid(gates[:, : 3 * H])
        i_g = sig[:, 0 * H:1 * H]
        f_g = sig[:, 1 * H:2 * H]
        o_g = sig[:, 2 * H:3 * H]
        g_g = jnp.tanh(gates[:, 3 * H:])
        c = f_g * c + i_g * g_g
        h = o_g * jnp.tanh(c)
        out = jax.nn.sigmoid(h) if apply_sigmoid else h   # fused final sigmoid
        y_ref[pl.ds(t * batch, batch), :] = out.astype(y_ref.dtype)

    h_sc[...] = h
    c_sc[...] = c


def lstm_layer(x2d, h0, c0, w_ih_t, w_hh_t, b, *, batch, block_t, apply_sigmoid):
    """One LSTM layer over a (padded) sequence held as a 2-D slab.

    x2d: (seq_pad*batch, in_dim) f32, row index = t*batch + b (time-major).
    Returns y2d: (seq_pad*batch, hidden) f32 (sigmoid fused if apply_sigmoid).
    """
    rows, in_dim = x2d.shape
    hidden = h0.shape[-1]
    four_h = 4 * hidden
    br = block_t * batch
    assert rows % br == 0
    num_blocks = rows // br

    kernel = functools.partial(_lstm_block_kernel, hidden=hidden, batch=batch,
                               block_t=block_t, apply_sigmoid=apply_sigmoid)
    return pl.pallas_call(
        kernel,
        out_shape=jax.ShapeDtypeStruct((rows, hidden), jnp.float32),
        grid_spec=pltpu.PrefetchScalarGridSpec(
            num_scalar_prefetch=0,
            grid=(num_blocks,),
            in_specs=[
                pl.BlockSpec((br, in_dim), lambda tb: (tb, 0)),       # x block
                pl.BlockSpec((batch, hidden), lambda tb: (0, 0)),     # h0
                pl.BlockSpec((batch, hidden), lambda tb: (0, 0)),     # c0
                pl.BlockSpec((in_dim, four_h), lambda tb: (0, 0)),    # W_ih (bf16)
                pl.BlockSpec((hidden, four_h), lambda tb: (0, 0)),    # W_hh (bf16)
                pl.BlockSpec((1, four_h), lambda tb: (0, 0)),         # bias
            ],
            out_specs=pl.BlockSpec((br, hidden), lambda tb: (tb, 0)),
            scratch_shapes=[
                pltpu.VMEM((batch, hidden), jnp.float32),   # h carry
                pltpu.VMEM((batch, hidden), jnp.float32),   # c carry
                pltpu.VMEM((br, four_h), jnp.float32),      # block input projection
            ],
        ),
        compiler_params=pltpu.CompilerParams(
            # Time carries state sequentially -> must stay "arbitrary".
            dimension_semantics=("arbitrary",)),
    )(x2d, h0, c0, w_ih_t, w_hh_t, b)


def _choose_block_t(seq, batch, max_block_t):
    """Timesteps per grid step; never collapses toward 1 (ragged seq is padded)."""
    bt = min(seq, max_block_t)
    if seq > bt:
        # Keep the per-step row block (bt*batch) sublane-aligned when multi-block.
        while (bt * batch) % 8 != 0:
            bt += 1
    return bt


def _pack_ifgo_to_ifog(a, hidden, axis):
    """Permute PyTorch gate order [i, f, g, o] -> [i, f, o, g] along `axis`."""
    i, f, g, o = jnp.split(a, 4, axis=axis)
    return jnp.concatenate([i, f, o, g], axis=axis)


# ----------------------------------------------------------------------------
# Full VanillaLSTM forward.
# ----------------------------------------------------------------------------
class VanillaLSTMPallas:
    def __init__(self, input_size, hidden_size, num_layers, output_size, key,
                 max_block_t=16):
        self.input_size = input_size
        self.hidden_size = hidden_size
        self.num_layers = num_layers
        self.output_size = output_size
        self.max_block_t = max_block_t

        scale = 1.0 / jnp.sqrt(hidden_size)
        self.params = []
        for layer in range(num_layers):
            in_dim = input_size if layer == 0 else hidden_size
            key, k1, k2, k3, k4 = jax.random.split(key, 5)
            # Stored transposed relative to PyTorch: (in_dim, 4H) / (H, 4H),
            # gate columns repacked [i,f,g,o] -> [i,f,o,g]; weights cast to bf16
            # (MXU operands), bias kept in f32.
            w_ih_t = jax.random.uniform(k1, (in_dim, 4 * hidden_size),
                                        jnp.float32, -scale, scale)
            w_hh_t = jax.random.uniform(k2, (hidden_size, 4 * hidden_size),
                                        jnp.float32, -scale, scale)
            b_ih = jax.random.uniform(k3, (4 * hidden_size,),
                                      jnp.float32, -scale, scale)
            b_hh = jax.random.uniform(k4, (4 * hidden_size,),
                                      jnp.float32, -scale, scale)
            w_ih_t = _pack_ifgo_to_ifog(w_ih_t, hidden_size, axis=1).astype(jnp.bfloat16)
            w_hh_t = _pack_ifgo_to_ifog(w_hh_t, hidden_size, axis=1).astype(jnp.bfloat16)
            b = _pack_ifgo_to_ifog(b_ih + b_hh, hidden_size, axis=0)
            b = b.reshape(1, 4 * hidden_size).astype(jnp.float32)
            self.params.append((w_ih_t, w_hh_t, b))

        # fc2 exists in the PyTorch module but is unused in forward(); kept for parity.
        key, k5, k6 = jax.random.split(key, 3)
        self.fc2_w = jax.random.uniform(k5, (output_size, hidden_size),
                                        jnp.float32, -scale, scale)
        self.fc2_b = jax.random.uniform(k6, (output_size,),
                                        jnp.float32, -scale, scale)

    def __call__(self, x, h0):
        """x: (seq, batch, input_size); h0 = (h_0, c_0), each (num_layers, batch, hidden)."""
        h_0, c_0 = h0
        seq, batch, _ = x.shape

        block_t = _choose_block_t(seq, batch, self.max_block_t)
        seq_pad = pl.cdiv(seq, block_t) * block_t

        # Time-major 2-D lane-dense slab; pad trailing timesteps if needed (they come
        # after all real timesteps, so they never corrupt real outputs and are sliced
        # off at the end; h_n/c_n are not returned by the PyTorch forward()).
        x2d = x.reshape(seq * batch, self.input_size)
        if seq_pad != seq:
            pad_rows = (seq_pad - seq) * batch
            x2d = jnp.concatenate(
                [x2d, jnp.zeros((pad_rows, self.input_size), x2d.dtype)], axis=0)

        layer_in = x2d
        for layer in range(self.num_layers):
            w_ih_t, w_hh_t, b = self.params[layer]
            last = layer == self.num_layers - 1
            layer_in = lstm_layer(layer_in, h_0[layer], c_0[layer],
                                  w_ih_t, w_hh_t, b,
                                  batch=batch, block_t=block_t, apply_sigmoid=last)

        y2d = layer_in[: seq * batch]
        # Mirrors PyTorch's `.view(-1, output_size)` on the contiguous (seq, batch, H)
        # output (row-major ordering is identical).
        return y2d.reshape(-1, self.output_size)


# ----------------------------------------------------------------------------
# Pure-JAX reference (same bf16-operand / f32-accumulation precision policy).
# ----------------------------------------------------------------------------
def reference_forward(model, x, h0):
    h_all, c_all = h0
    seq = x.shape[0]
    H = model.hidden_size
    layer_in = x
    for layer in range(model.num_layers):
        w_ih_t, w_hh_t, b = model.params[layer]
        h = h_all[layer]
        c = c_all[layer]
        outs = []
        for t in range(seq):
            gates = (jnp.dot(layer_in[t].astype(jnp.bfloat16), w_ih_t,
                             preferred_element_type=jnp.float32)
                     + jnp.dot(h.astype(jnp.bfloat16), w_hh_t,
                               preferred_element_type=jnp.float32)
                     + b)
            # Packed gate order [i, f, o, g].
            i_g = jax.nn.sigmoid(gates[:, 0 * H:1 * H])
            f_g = jax.nn.sigmoid(gates[:, 1 * H:2 * H])
            o_g = jax.nn.sigmoid(gates[:, 2 * H:3 * H])
            g_g = jnp.tanh(gates[:, 3 * H:4 * H])
            c = f_g * c + i_g * g_g
            h = o_g * jnp.tanh(c)
            outs.append(h)
        layer_in = jnp.stack(outs, axis=0)
    return jax.nn.sigmoid(layer_in).reshape(-1, model.output_size)


if __name__ == "__main__":
    import numpy as np

    seq, batch = 8, 2
    input_size, hidden_size, num_layers, output_size = 16, 32, 2, 32

    key = jax.random.PRNGKey(0)
    key, kx, kh, kc, kp = jax.random.split(key, 5)

    x = jax.random.normal(kx, (seq, batch, input_size), jnp.float32)
    h_0 = jax.random.normal(kh, (num_layers, batch, hidden_size), jnp.float32)
    c_0 = jax.random.normal(kc, (num_layers, batch, hidden_size), jnp.float32)

    model = VanillaLSTMPallas(input_size, hidden_size, num_layers, output_size, kp)

    y = jax.block_until_ready(model(x, (h_0, c_0)))

    y_ref = reference_forward(model, x, (h_0, c_0))
    # bf16 MXU operands -> small tolerance for transcendental / rounding differences.
    np.testing.assert_allclose(np.asarray(y), np.asarray(y_ref),
                               rtol=5e-3, atol=5e-3)
    assert y.shape == (seq * batch * hidden_size // output_size, output_size)

    print("KERNEL_OK")
</pallas_src>

<mosaic_0001>
module attributes {stable_mosaic.version = 11 : i64} {
  func.func @_lstm_block_kernel(%arg0: i32, %arg1: memref<16x16xf32, #tpu.memory_space<vmem>>, %arg2: memref<2x32xf32, #tpu.memory_space<vmem>>, %arg3: memref<2x32xf32, #tpu.memory_space<vmem>>, %arg4: memref<16x128xbf16, #tpu.memory_space<vmem>>, %arg5: memref<32x128xbf16, #tpu.memory_space<vmem>>, %arg6: memref<1x128xf32, #tpu.memory_space<vmem>>, %arg7: memref<16x32xf32, #tpu.memory_space<vmem>>, %arg8: memref<2x32xf32, #tpu.memory_space<vmem>>, %arg9: memref<2x32xf32, #tpu.memory_space<vmem>>, %arg10: memref<16x128xf32, #tpu.memory_space<vmem>>) attributes {dimension_semantics = [#tpu.dimension_semantics<arbitrary>], iteration_bounds = array<i64: 1>, scalar_prefetch = 0 : i64, scratch_operands = 3 : i64, tpu.core_type = #tpu.core_type<tc>, window_params = [{transform_indices = @transform_0, window_bounds = array<i64: 16, 16>}, {pipeline_mode = #tpu.pipeline_mode<synchronous>, transform_indices = @transform_1, window_bounds = array<i64: 2, 32>}, {pipeline_mode = #tpu.pipeline_mode<synchronous>, transform_indices = @transform_2, window_bounds = array<i64: 2, 32>}, {pipeline_mode = #tpu.pipeline_mode<synchronous>, transform_indices = @transform_3, window_bounds = array<i64: 16, 128>}, {pipeline_mode = #tpu.pipeline_mode<synchronous>, transform_indices = @transform_4, window_bounds = array<i64: 32, 128>}, {pipeline_mode = #tpu.pipeline_mode<synchronous>, transform_indices = @transform_5, window_bounds = array<i64: 1, 128>}, {transform_indices = @transform_6, window_bounds = array<i64: 16, 32>}]} {
    %c0_i32 = arith.constant 0 : i32
    %0 = arith.cmpi eq, %arg0, %c0_i32 : i32
    %1 = arith.extui %0 : i1 to i32
    %c0_i32_0 = arith.constant 0 : i32
    %2 = arith.cmpi ne, %1, %c0_i32_0 : i32
    scf.if %2 {
      %c0_59 = arith.constant 0 : index
      %c0_60 = arith.constant 0 : index
      %184 = vector.load %arg2[%c0_59, %c0_60] : memref<2x32xf32, #tpu.memory_space<vmem>>, vector<2x32xf32>
      %c0_61 = arith.constant 0 : index
      %c0_62 = arith.constant 0 : index
      %185 = vector.load %arg8[%c0_61, %c0_62] : memref<2x32xf32, #tpu.memory_space<vmem>>, vector<2x32xf32>
      tpu.vector_store %arg8[%c0_61, %c0_62], %184 {strides = array<i32>} : memref<2x32xf32, #tpu.memory_space<vmem>>, vector<2x32xf32>,
      %c0_63 = arith.constant 0 : index
      %c0_64 = arith.constant 0 : index
      %186 = vector.load %arg3[%c0_63, %c0_64] : memref<2x32xf32, #tpu.memory_space<vmem>>, vector<2x32xf32>
      %c0_65 = arith.constant 0 : index
      %c0_66 = arith.constant 0 : index
      %187 = vector.load %arg9[%c0_65, %c0_66] : memref<2x32xf32, #tpu.memory_space<vmem>>, vector<2x32xf32>
      tpu.vector_store %arg9[%c0_65, %c0_66], %186 {strides = array<i32>} : memref<2x32xf32, #tpu.memory_space<vmem>>, vector<2x32xf32>,
    } else {
    }
    %c0 = arith.constant 0 : index
    %c0_1 = arith.constant 0 : index
    %3 = vector.load %arg1[%c0, %c0_1] : memref<16x16xf32, #tpu.memory_space<vmem>>, vector<16x16xf32>
    %4 = arith.truncf %3 : vector<16x16xf32> to vector<16x16xbf16>
    %c0_2 = arith.constant 0 : index
    %c0_3 = arith.constant 0 : index
    %5 = vector.load %arg4[%c0_2, %c0_3] : memref<16x128xbf16, #tpu.memory_space<vmem>>, vector<16x128xbf16>
    %cst = arith.constant dense<0.000000e+00> : vector<16x128xf32>
    %6 = tpu.matmul %4, %5, %cst {dimension_numbers = #tpu.dot_dimension_numbers<[1], [0], [0], [1], [0, 0, 1, 1], [], []>} : vector<16x16xbf16>, vector<16x128xbf16>, vector<16x128xf32> -> vector<16x128xf32>
    %c0_4 = arith.constant 0 : index
    %c0_5 = arith.constant 0 : index
    %7 = vector.load %arg6[%c0_4, %c0_5] : memref<1x128xf32, #tpu.memory_space<vmem>>, vector<1x128xf32>
    %8 = vector.broadcast %7 : vector<1x128xf32> to vector<16x128xf32>
    %9 = arith.addf %6, %8 : vector<16x128xf32>
    %c0_6 = arith.constant 0 : index
    %c0_7 = arith.constant 0 : index
    %10 = vector.load %arg10[%c0_6, %c0_7] : memref<16x128xf32, #tpu.memory_space<vmem>>, vector<16x128xf32>
    tpu.vector_store %arg10[%c0_6, %c0_7], %9 {strides = array<i32>} : memref<16x128xf32, #tpu.memory_space<vmem>>, vector<16x128xf32>,
    %c0_8 = arith.constant 0 : index
    %c0_9 = arith.constant 0 : index
    %11 = vector.load %arg5[%c0_8, %c0_9] : memref<32x128xbf16, #tpu.memory_space<vmem>>, vector<32x128xbf16>
    %c0_10 = arith.constant 0 : index
    %c0_11 = arith.constant 0 : index
    %12 = vector.load %arg8[%c0_10, %c0_11] : memref<2x32xf32, #tpu.memory_space<vmem>>, vector<2x32xf32>
    %c0_12 = arith.constant 0 : index
    %c0_13 = arith.constant 0 : index
    %13 = vector.load %arg9[%c0_12, %c0_13] : memref<2x32xf32, #tpu.memory_space<vmem>>, vector<2x32xf32>
    %c0_14 = arith.constant 0 : index
    %c0_15 = arith.constant 0 : index
    %14 = vector.load %arg10[%c0_14, %c0_15] : memref<16x128xf32, #tpu.memory_space<vmem>>, vector<2x128xf32>
    %15 = arith.truncf %12 : vector<2x32xf32> to vector<2x32xbf16>
    %cst_16 = arith.constant dense<0.000000e+00> : vector<2x128xf32>
    %16 = tpu.matmul %15, %11, %cst_16 {dimension_numbers = #tpu.dot_dimension_numbers<[1], [0], [0], [1], [0, 0, 1, 1], [], []>} : vector<2x32xbf16>, vector<32x128xbf16>, vector<2x128xf32> -> vector<2x128xf32>
    %17 = arith.addf %14, %16 : vector<2x128xf32>
    %18 = vector.extract_strided_slice %17 {offsets = [0, 0], sizes = [2, 96], strides = [1, 1]} : vector<2x128xf32> to vector<2x96xf32>
    %19 = arith.negf %18 : vector<2x96xf32>
    %20 = math.exp %19 : vector<2x96xf32>
    %cst_17 = arith.constant 1.000000e+00 : f32
    %21 = vector.broadcast %cst_17 : f32 to vector<2x96xf32>
    %22 = arith.addf %21, %20 : vector<2x96xf32>
    %23 = arith.divf %21, %22 : vector<2x96xf32>
    %24 = vector.extract_strided_slice %23 {offsets = [0, 0], sizes = [2, 32], strides = [1, 1]} : vector<2x96xf32> to vector<2x32xf32>
    %25 = vector.extract_strided_slice %23 {offsets = [0, 32], sizes = [2, 32], strides = [1, 1]} : vector<2x96xf32> to vector<2x32xf32>
    %26 = vector.extract_strided_slice %23 {offsets = [0, 64], sizes = [2, 32], strides = [1, 1]} : vector<2x96xf32> to vector<2x32xf32>
    %27 = vector.extract_strided_slice %17 {offsets = [0, 96], sizes = [2, 32], strides = [1, 1]} : vector<2x128xf32> to vector<2x32xf32>
    %28 = math.tanh %27 : vector<2x32xf32>
    %29 = arith.mulf %25, %13 : vector<2x32xf32>
    %30 = arith.mulf %24, %28 : vector<2x32xf32>
    %31 = arith.addf %29, %30 : vector<2x32xf32>
    %32 = math.tanh %31 : vector<2x32xf32>
    %33 = arith.mulf %26, %32 : vector<2x32xf32>
    %c0_18 = arith.constant 0 : index
    %c0_19 = arith.constant 0 : index
    %34 = vector.load %arg7[%c0_18, %c0_19] : memref<16x32xf32, #tpu.memory_space<vmem>>, vector<2x32xf32>
    tpu.vector_store %arg7[%c0_18, %c0_19], %33 {strides = array<i32>} : memref<16x32xf32, #tpu.memory_space<vmem>>, vector<2x32xf32>,
    %c2 = arith.constant 2 : index
    %c0_20 = arith.constant 0 : index
    %35 = vector.load %arg10[%c2, %c0_20] : memref<16x128xf32, #tpu.memory_space<vmem>>, vector<2x128xf32>
    %36 = arith.truncf %33 : vector<2x32xf32> to vector<2x32xbf16>
    %cst_21 = arith.constant dense<0.000000e+00> : vector<2x128xf32>
    %37 = tpu.matmul %36, %11, %cst_21 {dimension_numbers = #tpu.dot_dimension_numbers<[1], [0], [0], [1], [0, 0, 1, 1], [], []>} : vector<2x32xbf16>, vector<32x128xbf16>, vector<2x128xf32> -> vector<2x128xf32>
    %38 = arith.addf %35, %37 : vector<2x128xf32>
    %39 = vector.extract_strided_slice %38 {offsets = [0, 0], sizes = [2, 96], strides = [1, 1]} : vector<2x128xf32> to vector<2x96xf32>
    %40 = arith.negf %39 : vector<2x96xf32>
    %41 = math.exp %40 : vector<2x96xf32>
    %cst_22 = arith.constant 1.000000e+00 : f32
    %42 = vector.broadcast %cst_22 : f32 to vector<2x96xf32>
    %43 = arith.addf %42, %41 : vector<2x96xf32>
    %44 = arith.divf %42, %43 : vector<2x96xf32>
    %45 = vector.extract_strided_slice %44 {offsets = [0, 0], sizes = [2, 32], strides = [1, 1]} : vector<2x96xf32> to vector<2x32xf32>
    %46 = vector.extract_strided_slice %44 {offsets = [0, 32], sizes = [2, 32], strides = [1, 1]} : vector<2x96xf32> to vector<2x32xf32>
    %47 = vector.extract_strided_slice %44 {offsets = [0, 64], sizes = [2, 32], strides = [1, 1]} : vector<2x96xf32> to vector<2x32xf32>
    %48 = vector.extract_strided_slice %38 {offsets = [0, 96], sizes = [2, 32], strides = [1, 1]} : vector<2x128xf32> to vector<2x32xf32>
    %49 = math.tanh %48 : vector<2x32xf32>
    %50 = arith.mulf %46, %31 : vector<2x32xf32>
    %51 = arith.mulf %45, %49 : vector<2x32xf32>
    %52 = arith.addf %50, %51 : vector<2x32xf32>
    %53 = math.tanh %52 : vector<2x32xf32>
    %54 = arith.mulf %47, %53 : vector<2x32xf32>
    %c2_23 = arith.constant 2 : index
    %c0_24 = arith.constant 0 : index
    %55 = vector.load %arg7[%c2_23, %c0_24] : memref<16x32xf32, #tpu.memory_space<vmem>>, vector<2x32xf32>
    tpu.vector_store %arg7[%c2_23, %c0_24], %54 {strides = array<i32>} : memref<16x32xf32, #tpu.memory_space<vmem>>, vector<2x32xf32>,
    %c4 = arith.constant 4 : index
    %c0_25 = arith.constant 0 : index
    %56 = vector.load %arg10[%c4, %c0_25] : memref<16x128xf32, #tpu.memory_space<vmem>>, vector<2x128xf32>
    %57 = arith.truncf %54 : vector<2x32xf32> to vector<2x32xbf16>
    %cst_26 = arith.constant dense<0.000000e+00> : vector<2x128xf32>
    %58 = tpu.matmul %57, %11, %cst_26 {dimension_numbers = #tpu.dot_dimension_numbers<[1], [0], [0], [1], [0, 0, 1, 1], [], []>} : vector<2x32xbf16>, vector<32x128xbf16>, vector<2x128xf32> -> vector<2x128xf32>
    %59 = arith.addf %56, %58 : vector<2x128xf32>
    %60 = vector.extract_strided_slice %59 {offsets = [0, 0], sizes = [2, 96], strides = [1, 1]} : vector<2x128xf32> to vector<2x96xf32>
    %61 = arith.negf %60 : vector<2x96xf32>
    %62 = math.exp %61 : vector<2x96xf32>
    %cst_27 = arith.constant 1.000000e+00 : f32
    %63 = vector.broadcast %cst_27 : f32 to vector<2x96xf32>
    %64 = arith.addf %63, %62 : vector<2x96xf32>
    %65 = arith.divf %63, %64 : vector<2x96xf32>
    %66 = vector.extract_strided_slice %65 {offsets = [0, 0], sizes = [2, 32], strides = [1, 1]} : vector<2x96xf32> to vector<2x32xf32>
    %67 = vector.extract_strided_slice %65 {offsets = [0, 32], sizes = [2, 32], strides = [1, 1]} : vector<2x96xf32> to vector<2x32xf32>
    %68 = vector.extract_strided_slice %65 {offsets = [0, 64], sizes = [2, 32], strides = [1, 1]} : vector<2x96xf32> to vector<2x32xf32>
    %69 = vector.extract_strided_slice %59 {offsets = [0, 96], sizes = [2, 32], strides = [1, 1]} : vector<2x128xf32> to vector<2x32xf32>
    %70 = math.tanh %69 : vector<2x32xf32>
    %71 = arith.mulf %67, %52 : vector<2x32xf32>
    %72 = arith.mulf %66, %70 : vector<2x32xf32>
    %73 = arith.addf %71, %72 : vector<2x32xf32>
    %74 = math.tanh %73 : vector<2x32xf32>
    %75 = arith.mulf %68, %74 : vector<2x32xf32>
    %c4_28 = arith.constant 4 : index
    %c0_29 = arith.constant 0 : index
    %76 = vector.load %arg7[%c4_28, %c0_29] : memref<16x32xf32, #tpu.memory_space<vmem>>, vector<2x32xf32>
    tpu.vector_store %arg7[%c4_28, %c0_29], %75 {strides = array<i32>} : memref<16x32xf32, #tpu.memory_space<vmem>>, vector<2x32xf32>,
    %c6 = arith.constant 6 : index
    %c0_30 = arith.constant 0 : index
    %77 = vector.load %arg10[%c6, %c0_30] : memref<16x128xf32, #tpu.memory_space<vmem>>, vector<2x128xf32>
    %78 = arith.truncf %75 : vector<2x32xf32> to vector<2x32xbf16>
    %cst_31 = arith.constant dense<0.000000e+00> : vector<2x128xf32>
    %79 = tpu.matmul %78, %11, %cst_31 {dimension_numbers = #tpu.dot_dimension_numbers<[1], [0], [0], [1], [0, 0, 1, 1], [], []>} : vector<2x32xbf16>, vector<32x128xbf16>, vector<2x128xf32> -> vector<2x128xf32>
    %80 = arith.addf %77, %79 : vector<2x128xf32>
    %81 = vector.extract_strided_slice %80 {offsets = [0, 0], sizes = [2, 96], strides = [1, 1]} : vector<2x128xf32> to vector<2x96xf32>
    %82 = arith.negf %81 : vector<2x96xf32>
    %83 = math.exp %82 : vector<2x96xf32>
    %cst_32 = arith.constant 1.000000e+00 : f32
    %84 = vector.broadcast %cst_32 : f32 to vector<2x96xf32>
    %85 = arith.addf %84, %83 : vector<2x96xf32>
    %86 = arith.divf %84, %85 : vector<2x96xf32>
    %87 = vector.extract_strided_slice %86 {offsets = [0, 0], sizes = [2, 32], strides = [1, 1]} : vector<2x96xf32> to vector<2x32xf32>
    %88 = vector.extract_strided_slice %86 {offsets = [0, 32], sizes = [2, 32], strides = [1, 1]} : vector<2x96xf32> to vector<2x32xf32>
    %89 = vector.extract_strided_slice %86 {offsets = [0, 64], sizes = [2, 32], strides = [1, 1]} : vector<2x96xf32> to vector<2x32xf32>
    %90 = vector.extract_strided_slice %80 {offsets = [0, 96], sizes = [2, 32], strides = [1, 1]} : vector<2x128xf32> to vector<2x32xf32>
    %91 = math.tanh %90 : vector<2x32xf32>
    %92 = arith.mulf %88, %73 : vector<2x32xf32>
    %93 = arith.mulf %87, %91 : vector<2x32xf32>
    %94 = arith.addf %92, %93 : vector<2x32xf32>
    %95 = math.tanh %94 : vector<2x32xf32>
    %96 = arith.mulf %89, %95 : vector<2x32xf32>
    %c6_33 = arith.constant 6 : index
    %c0_34 = arith.constant 0 : index
    %97 = vector.load %arg7[%c6_33, %c0_34] : memref<16x32xf32, #tpu.memory_space<vmem>>, vector<2x32xf32>
    tpu.vector_store %arg7[%c6_33, %c0_34], %96 {strides = array<i32>} : memref<16x32xf32, #tpu.memory_space<vmem>>, vector<2x32xf32>,
    %c8 = arith.constant 8 : index
    %c0_35 = arith.constant 0 : index
    %98 = vector.load %arg10[%c8, %c0_35] : memref<16x128xf32, #tpu.memory_space<vmem>>, vector<2x128xf32>
    %99 = arith.truncf %96 : vector<2x32xf32> to vector<2x32xbf16>
    %cst_36 = arith.constant dense<0.000000e+00> : vector<2x128xf32>
    %100 = tpu.matmul %99, %11, %cst_36 {dimension_numbers = #tpu.dot_dimension_numbers<[1], [0], [0], [1], [0, 0, 1, 1], [], []>} : vector<2x32xbf16>, vector<32x128xbf16>, vector<2x128xf32> -> vector<2x128xf32>
    %101 = arith.addf %98, %100 : vector<2x128xf32>
    %102 = vector.extract_strided_slice %101 {offsets = [0, 0], sizes = [2, 96], strides = [1, 1]} : vector<2x128xf32> to vector<2x96xf32>
    %103 = arith.negf %102 : vector<2x96xf32>
    %104 = math.exp %103 : vector<2x96xf32>
    %cst_37 = arith.constant 1.000000e+00 : f32
    %105 = vector.broadcast %cst_37 : f32 to vector<2x96xf32>
    %106 = arith.addf %105, %104 : vector<2x96xf32>
    %107 = arith.divf %105, %106 : vector<2x96xf32>
    %108 = vector.extract_strided_slice %107 {offsets = [0, 0], sizes = [2, 32], strides = [1, 1]} : vector<2x96xf32> to vector<2x32xf32>
    %109 = vector.extract_strided_slice %107 {offsets = [0, 32], sizes = [2, 32], strides = [1, 1]} : vector<2x96xf32> to vector<2x32xf32>
    %110 = vector.extract_strided_slice %107 {offsets = [0, 64], sizes = [2, 32], strides = [1, 1]} : vector<2x96xf32> to vector<2x32xf32>
    %111 = vector.extract_strided_slice %101 {offsets = [0, 96], sizes = [2, 32], strides = [1, 1]} : vector<2x128xf32> to vector<2x32xf32>
    %112 = math.tanh %111 : vector<2x32xf32>
    %113 = arith.mulf %109, %94 : vector<2x32xf32>
    %114 = arith.mulf %108, %112 : vector<2x32xf32>
    %115 = arith.addf %113, %114 : vector<2x32xf32>
    %116 = math.tanh %115 : vector<2x32xf32>
    %117 = arith.mulf %110, %116 : vector<2x32xf32>
    %c8_38 = arith.constant 8 : index
    %c0_39 = arith.constant 0 : index
    %118 = vector.load %arg7[%c8_38, %c0_39] : memref<16x32xf32, #tpu.memory_space<vmem>>, vector<2x32xf32>
    tpu.vector_store %arg7[%c8_38, %c0_39], %117 {strides = array<i32>} : memref<16x32xf32, #tpu.memory_space<vmem>>, vector<2x32xf32>,
    %c10 = arith.constant 10 : index
    %c0_40 = arith.constant 0 : index
    %119 = vector.load %arg10[%c10, %c0_40] : memref<16x128xf32, #tpu.memory_space<vmem>>, vector<2x128xf32>
    %120 = arith.truncf %117 : vector<2x32xf32> to vector<2x32xbf16>
    %cst_41 = arith.constant dense<0.000000e+00> : vector<2x128xf32>
    %121 = tpu.matmul %120, %11, %cst_41 {dimension_numbers = #tpu.dot_dimension_numbers<[1], [0], [0], [1], [0, 0, 1, 1], [], []>} : vector<2x32xbf16>, vector<32x128xbf16>, vector<2x128xf32> -> vector<2x128xf32>
    %122 = arith.addf %119, %121 : vector<2x128xf32>
    %123 = vector.extract_strided_slice %122 {offsets = [0, 0], sizes = [2, 96], strides = [1, 1]} : vector<2x128xf32> to vector<2x96xf32>
    %124 = arith.negf %123 : vector<2x96xf32>
    %125 = math.exp %124 : vector<2x96xf32>
    %cst_42 = arith.constant 1.000000e+00 : f32
    %126 = vector.broadcast %cst_42 : f32 to vector<2x96xf32>
    %127 = arith.addf %126, %125 : vector<2x96xf32>
    %128 = arith.divf %126, %127 : vector<2x96xf32>
    %129 = vector.extract_strided_slice %128 {offsets = [0, 0], sizes = [2, 32], strides = [1, 1]} : vector<2x96xf32> to vector<2x32xf32>
    %130 = vector.extract_strided_slice %128 {offsets = [0, 32], sizes = [2, 32], strides = [1, 1]} : vector<2x96xf32> to vector<2x32xf32>
    %131 = vector.extract_strided_slice %128 {offsets = [0, 64], sizes = [2, 32], strides = [1, 1]} : vector<2x96xf32> to vector<2x32xf32>
    %132 = vector.extract_strided_slice %122 {offsets = [0, 96], sizes = [2, 32], strides = [1, 1]} : vector<2x128xf32> to vector<2x32xf32>
    %133 = math.tanh %132 : vector<2x32xf32>
    %134 = arith.mulf %130, %115 : vector<2x32xf32>
    %135 = arith.mulf %129, %133 : vector<2x32xf32>
    %136 = arith.addf %134, %135 : vector<2x32xf32>
    %137 = math.tanh %136 : vector<2x32xf32>
    %138 = arith.mulf %131, %137 : vector<2x32xf32>
    %c10_43 = arith.constant 10 : index
    %c0_44 = arith.constant 0 : index
    %139 = vector.load %arg7[%c10_43, %c0_44] : memref<16x32xf32, #tpu.memory_space<vmem>>, vector<2x32xf32>
    tpu.vector_store %arg7[%c10_43, %c0_44], %138 {strides = array<i32>} : memref<16x32xf32, #tpu.memory_space<vmem>>, vector<2x32xf32>,
    %c12 = arith.constant 12 : index
    %c0_45 = arith.constant 0 : index
    %140 = vector.load %arg10[%c12, %c0_45] : memref<16x128xf32, #tpu.memory_space<vmem>>, vector<2x128xf32>
    %141 = arith.truncf %138 : vector<2x32xf32> to vector<2x32xbf16>
    %cst_46 = arith.constant dense<0.000000e+00> : vector<2x128xf32>
    %142 = tpu.matmul %141, %11, %cst_46 {dimension_numbers = #tpu.dot_dimension_numbers<[1], [0], [0], [1], [0, 0, 1, 1], [], []>} : vector<2x32xbf16>, vector<32x128xbf16>, vector<2x128xf32> -> vector<2x128xf32>
    %143 = arith.addf %140, %142 : vector<2x128xf32>
    %144 = vector.extract_strided_slice %143 {offsets = [0, 0], sizes = [2, 96], strides = [1, 1]} : vector<2x128xf32> to vector<2x96xf32>
    %145 = arith.negf %144 : vector<2x96xf32>
    %146 = math.exp %145 : vector<2x96xf32>
    %cst_47 = arith.constant 1.000000e+00 : f32
    %147 = vector.broadcast %cst_47 : f32 to vector<2x96xf32>
    %148 = arith.addf %147, %146 : vector<2x96xf32>
    %149 = arith.divf %147, %148 : vector<2x96xf32>
    %150 = vector.extract_strided_slice %149 {offsets = [0, 0], sizes = [2, 32], strides = [1, 1]} : vector<2x96xf32> to vector<2x32xf32>
    %151 = vector.extract_strided_slice %149 {offsets = [0, 32], sizes = [2, 32], strides = [1, 1]} : vector<2x96xf32> to vector<2x32xf32>
    %152 = vector.extract_strided_slice %149 {offsets = [0, 64], sizes = [2, 32], strides = [1, 1]} : vector<2x96xf32> to vector<2x32xf32>
    %153 = vector.extract_strided_slice %143 {offsets = [0, 96], sizes = [2, 32], strides = [1, 1]} : vector<2x128xf32> to vector<2x32xf32>
    %154 = math.tanh %153 : vector<2x32xf32>
    %155 = arith.mulf %151, %136 : vector<2x32xf32>
    %156 = arith.mulf %150, %154 : vector<2x32xf32>
    %157 = arith.addf %155, %156 : vector<2x32xf32>
    %158 = math.tanh %157 : vector<2x32xf32>
    %159 = arith.mulf %152, %158 : vector<2x32xf32>
    %c12_48 = arith.constant 12 : index
    %c0_49 = arith.constant 0 : index
    %160 = vector.load %arg7[%c12_48, %c0_49] : memref<16x32xf32, #tpu.memory_space<vmem>>, vector<2x32xf32>
    tpu.vector_store %arg7[%c12_48, %c0_49], %159 {strides = array<i32>} : memref<16x32xf32, #tpu.memory_space<vmem>>, vector<2x32xf32>,
    %c14 = arith.constant 14 : index
    %c0_50 = arith.constant 0 : index
    %161 = vector.load %arg10[%c14, %c0_50] : memref<16x128xf32, #tpu.memory_space<vmem>>, vector<2x128xf32>
    %162 = arith.truncf %159 : vector<2x32xf32> to vector<2x32xbf16>
    %cst_51 = arith.constant dense<0.000000e+00> : vector<2x128xf32>
    %163 = tpu.matmul %162, %11, %cst_51 {dimension_numbers = #tpu.dot_dimension_numbers<[1], [0], [0], [1], [0, 0, 1, 1], [], []>} : vector<2x32xbf16>, vector<32x128xbf16>, vector<2x128xf32> -> vector<2x128xf32>
    %164 = arith.addf %161, %163 : vector<2x128xf32>
    %165 = vector.extract_strided_slice %164 {offsets = [0, 0], sizes = [2, 96], strides = [1, 1]} : vector<2x128xf32> to vector<2x96xf32>
    %166 = arith.negf %165 : vector<2x96xf32>
    %167 = math.exp %166 : vector<2x96xf32>
    %cst_52 = arith.constant 1.000000e+00 : f32
    %168 = vector.broadcast %cst_52 : f32 to vector<2x96xf32>
    %169 = arith.addf %168, %167 : vector<2x96xf32>
    %170 = arith.divf %168, %169 : vector<2x96xf32>
    %171 = vector.extract_strided_slice %170 {offsets = [0, 0], sizes = [2, 32], strides = [1, 1]} : vector<2x96xf32> to vector<2x32xf32>
    %172 = vector.extract_strided_slice %170 {offsets = [0, 32], sizes = [2, 32], strides = [1, 1]} : vector<2x96xf32> to vector<2x32xf32>
    %173 = vector.extract_strided_slice %170 {offsets = [0, 64], sizes = [2, 32], strides = [1, 1]} : vector<2x96xf32> to vector<2x32xf32>
    %174 = vector.extract_strided_slice %164 {offsets = [0, 96], sizes = [2, 32], strides = [1, 1]} : vector<2x128xf32> to vector<2x32xf32>
    %175 = math.tanh %174 : vector<2x32xf32>
    %176 = arith.mulf %172, %157 : vector<2x32xf32>
    %177 = arith.mulf %171, %175 : vector<2x32xf32>
    %178 = arith.addf %176, %177 : vector<2x32xf32>
    %179 = math.tanh %178 : vector<2x32xf32>
    %180 = arith.mulf %173, %179 : vector<2x32xf32>
    %c14_53 = arith.constant 14 : index
    %c0_54 = arith.constant 0 : index
    %181 = vector.load %arg7[%c14_53, %c0_54] : memref<16x32xf32, #tpu.memory_space<vmem>>, vector<2x32xf32>
    tpu.vector_store %arg7[%c14_53, %c0_54], %180 {strides = array<i32>} : memref<16x32xf32, #tpu.memory_space<vmem>>, vector<2x32xf32>,
    %c0_55 = arith.constant 0 : index
    %c0_56 = arith.constant 0 : index
    %182 = vector.load %arg8[%c0_55, %c0_56] : memref<2x32xf32, #tpu.memory_space<vmem>>, vector<2x32xf32>
    tpu.vector_store %arg8[%c0_55, %c0_56], %180 {strides = array<i32>} : memref<2x32xf32, #tpu.memory_space<vmem>>, vector<2x32xf32>,
    %c0_57 = arith.constant 0 : index
    %c0_58 = arith.constant 0 : index
    %183 = vector.load %arg9[%c0_57, %c0_58] : memref<2x32xf32, #tpu.memory_space<vmem>>, vector<2x32xf32>
    tpu.vector_store %arg9[%c0_57, %c0_58], %178 {strides = array<i32>} : memref<2x32xf32, #tpu.memory_space<vmem>>, vector<2x32xf32>,
    return
  }
  func.func @transform_0(%arg0: i32) -> (i32, i32) {
    %c0_i32 = arith.constant 0 : i32
    %c0_i32_0 = arith.constant 0 : i32
    return %arg0, %c0_i32 : i32, i32
  }
  func.func @transform_1(%arg0: i32) -> (i32, i32) {
    %c0_i32 = arith.constant 0 : i32
    %c0_i32_0 = arith.constant 0 : i32
    %c0_i32_1 = arith.constant 0 : i32
    return %c0_i32, %c0_i32_0 : i32, i32
  }
  func.func @transform_2(%arg0: i32) -> (i32, i32) {
    %c0_i32 = arith.constant 0 : i32
    %c0_i32_0 = arith.constant 0 : i32
    %c0_i32_1 = arith.constant 0 : i32
    return %c0_i32, %c0_i32_0 : i32, i32
  }
  func.func @transform_3(%arg0: i32) -> (i32, i32) {
    %c0_i32 = arith.constant 0 : i32
    %c0_i32_0 = arith.constant 0 : i32
    %c0_i32_1 = arith.constant 0 : i32
    return %c0_i32, %c0_i32_0 : i32, i32
  }
  func.func @transform_4(%arg0: i32) -> (i32, i32) {
    %c0_i32 = arith.constant 0 : i32
    %c0_i32_0 = arith.constant 0 : i32
    %c0_i32_1 = arith.constant 0 : i32
    return %c0_i32, %c0_i32_0 : i32, i32
  }
  func.func @transform_5(%arg0: i32) -> (i32, i32) {
    %c0_i32 = arith.constant 0 : i32
    %c0_i32_0 = arith.constant 0 : i32
    %c0_i32_1 = arith.constant 0 : i32
    return %c0_i32, %c0_i32_0 : i32, i32
  }
  func.func @transform_6(%arg0: i32) -> (i32, i32) {
    %c0_i32 = arith.constant 0 : i32
    %c0_i32_0 = arith.constant 0 : i32
    return %arg0, %c0_i32 : i32, i32
  }
}

</mosaic_0001>

<llo_original>
// kernel: tpu_custom_call.1
$region0: #{tpu_custom_call.1}
  #allocation0 [shape = 'u32[]', space=smem, size = 0x4, offset = 0x4, fixed_abs, tag = 'smem constant byte address 0x4 - core index']
  #allocation1 [shape = 'u32[144,128]{1,0:T(1,128)}', space=vmem, size = 0x12000, scoped, tag = 'internal scratch']
  #allocation2 [shape = 'f32[2,32]{1,0:T(2,128)}', space=vmem, size = 0x400, scoped, tag = 'scratch operand']
  #allocation3 [shape = 'f32[2,32]{1,0:T(2,128)}', space=vmem, size = 0x400, scoped, tag = 'scratch operand']
  #allocation4 [shape = 'f32[16,128]{1,0:T(8,128)}', space=vmem, size = 0x2000, scoped, tag = 'scratch operand']
  %s0 = inlined_call_operand.hbm [shape: f32[16,16], index: 0, kind: input, shape index: {}]
  %s1 = inlined_call_operand.hbm [shape: f32[2,32], index: 1, kind: input, shape index: {}]
  %s2 = inlined_call_operand.vmem [shape: f32[2,32], index: 2, kind: input, shape index: {}]
  %s3 = inlined_call_operand.hbm [shape: bf16[16,128], index: 3, kind: input, shape index: {}]
  %s4 = inlined_call_operand.hbm [shape: bf16[32,128], index: 4, kind: input, shape index: {}]
  %s5 = inlined_call_operand.vmem [shape: f32[1,128], index: 5, kind: input, shape index: {}]
  %s6 = inlined_call_operand.hbm [shape: f32[16,32], index: 6, kind: output, shape index: {}]
  %s7 = sld [smem:[#allocation0]]
  $region54: #{tpu_custom_call.1} parent=0
    _
  %s9 = ssub.s32 1, %s7
  %s10 = scalar_select 0, %s9, %s7
  $region1: #{tpu_custom_call.1} parent=0
    #allocation5 [shape = 'u8[8192]{0}', space=vmem, size = 0x2000, scoped, tag = 'input window, operand 0, single buffered']
    #allocation6 [shape = 's32[1]{0}', space=sflag, size = 0x4, scoped, tag = 'scoped memory for tpu_custom_call.1']
    #allocation7 [shape = 's32[1]{0}', space=sflag, size = 0x4, scoped, tag = 'scoped memory for tpu_custom_call.1']
    #allocation8 [shape = 'u8[1024]{0}', space=vmem, size = 0x400, scoped, tag = 'input window, operand 1, single buffered']
    #allocation9 [shape = 's32[1]{0}', space=sflag, size = 0x4, scoped, tag = 'scoped memory for tpu_custom_call.1']
    #allocation10 [shape = 'u8[4096]{0}', space=vmem, size = 0x1000, scoped, tag = 'input window, operand 3, single buffered']
    #allocation11 [shape = 'u8[8192]{0}', space=vmem, size = 0x2000, scoped, tag = 'input window, operand 4, single buffered']
    #allocation12 [shape = 's32[1]{0}', space=sflag, size = 0x4, scoped, tag = 'scoped memory for tpu_custom_call.1']
    #allocation13 [shape = 'u8[8192]{0}', space=vmem, size = 0x2000, scoped, tag = 'output window, operand 0, single buffered']
    %11 = vsyncpa [#allocation6], 0
    %12 = vsyncpa [#allocation9], 0
    %13 = vsyncpa [#allocation12], 0
    %14 = vsyncpa [#allocation7], 0
    // Predicated region
    $region2: #{tpu_custom_call.1} parent=1 // pred_check
      _
    $region3: #{tpu_custom_call.1} parent=1 // pred_check_branch
      %16 = sbr.rel (0) target = $region5
    $region4: #{tpu_custom_call.1} parent=1 // pred_region
      %s18 = ssub.s32 256, 256
      %19 = vsyncadd [#allocation6], %s18
      %s20 = sshll.u32 [#allocation5], 4
      %s21 = int_to_ptr.vmem [resolvable:$true] %s20
      %26 = dma.hbm_to_vmem [thread:$0]  %s0, 256, %s21, [#allocation6], 128, 128, 8
    $region5: #{tpu_custom_call.1} parent=1 // pred_fallthru
      _
    // Predicated region
    $region6: #{tpu_custom_call.1} parent=1 // pred_check
      _
    $region7: #{tpu_custom_call.1} parent=1 // pred_check_branch
      %28 = sbr.rel (0) target = $region9
    $region8: #{tpu_custom_call.1} parent=1 // pred_region
      %s30 = ssub.s32 32, 32
      %31 = vsyncadd [#allocation9], %s30
      %s33 = sshll.u32 [#allocation8], 4
      %s34 = int_to_ptr.vmem [resolvable:$true] %s33
      %36 = dma.hbm_to_vmem [thread:$0]  %s1, 32, %s34, [#allocation9]
    $region9: #{tpu_custom_call.1} parent=1 // pred_fallthru
      _
    // Predicated region
    $region10: #{tpu_custom_call.1} parent=1 // pred_check
      _
    $region11: #{tpu_custom_call.1} parent=1 // pred_check_branch
      %38 = sbr.rel (0) target = $region13
    $region12: #{tpu_custom_call.1} parent=1 // pred_region
      _
    $region13: #{tpu_custom_call.1} parent=1 // pred_fallthru
      _
    // Predicated region
    $region14: #{tpu_custom_call.1} parent=1 // pred_check
      _
    $region15: #{tpu_custom_call.1} parent=1 // pred_check_branch
      %40 = sbr.rel (0) target = $region17
    $region16: #{tpu_custom_call.1} parent=1 // pred_region
      %s42 = ssub.s32 128, 128
      %43 = vsyncadd [#allocation9], %s42
      %s44 = sshll.u32 [#allocation10], 4
      %s45 = int_to_ptr.vmem [resolvable:$true] %s44
      %50 = dma.hbm_to_vmem [thread:$0]  %s3, 128, %s45, [#allocation9], 64, 64, 4
    $region17: #{tpu_custom_call.1} parent=1 // pred_fallthru
      _
    // Predicated region
    $region18: #{tpu_custom_call.1} parent=1 // pred_check
      _
    $region19: #{tpu_custom_call.1} parent=1 // pred_check_branch
      %52 = sbr.rel (0) target = $region21
    $region20: #{tpu_custom_call.1} parent=1 // pred_region
      %s54 = ssub.s32 256, 256
      %55 = vsyncadd [#allocation12], %s54
      %s56 = sshll.u32 [#allocation11], 4
      %s57 = int_to_ptr.vmem [resolvable:$true] %s56
      %62 = dma.hbm_to_vmem [thread:$0]  %s4, 256, %s57, [#allocation12], 64, 64, 4
    $region21: #{tpu_custom_call.1} parent=1 // pred_fallthru
      _
    // Predicated region
    $region22: #{tpu_custom_call.1} parent=1 // pred_check
      _
    $region23: #{tpu_custom_call.1} parent=1 // pred_check_branch
      %64 = sbr.rel (0) target = $region25
    $region24: #{tpu_custom_call.1} parent=1 // pred_region
      _
    $region25: #{tpu_custom_call.1} parent=1 // pred_fallthru
      _
    // Predicated region
    $region26: #{tpu_custom_call.1} parent=1 // pred_check
      _
    $region27: #{tpu_custom_call.1} parent=1 // pred_check_branch
      %66 = sbr.rel (0) target = $region29
    $region28: #{tpu_custom_call.1} parent=1 // pred_region
      %67 = dma.done [#allocation6], 256
    $region29: #{tpu_custom_call.1} parent=1 // pred_fallthru
      _
    // Predicated region
    $region30: #{tpu_custom_call.1} parent=1 // pred_check
      _
    $region31: #{tpu_custom_call.1} parent=1 // pred_check_branch
      %69 = sbr.rel (0) target = $region33
    $region32: #{tpu_custom_call.1} parent=1 // pred_region
      %70 = dma.done [#allocation9], 32
    $region33: #{tpu_custom_call.1} parent=1 // pred_fallthru
      _
    // Predicated region
    $region34: #{tpu_custom_call.1} parent=1 // pred_check
      _
    $region35: #{tpu_custom_call.1} parent=1 // pred_check_branch
      %72 = sbr.rel (0) target = $region37
    $region36: #{tpu_custom_call.1} parent=1 // pred_region
      %73 = dma.done [#allocation9], 128
    $region37: #{tpu_custom_call.1} parent=1 // pred_fallthru
      _
    // Predicated region
    $region38: #{tpu_custom_call.1} parent=1 // pred_check
      _
    $region39: #{tpu_custom_call.1} parent=1 // pred_check_branch
      %75 = sbr.rel (0) target = $region41
    $region40: #{tpu_custom_call.1} parent=1 // pred_region
      %76 = dma.done [#allocation12], 256
    $region41: #{tpu_custom_call.1} parent=1 // pred_fallthru
      _
    %p78 = scmp.eq.s32.totalorder 0, 0
    // Predicated region
    $region42: #{tpu_custom_call.1} parent=1 // pred_check
      %p79 = pneg %p78
    $region43: #{tpu_custom_call.1} parent=1 // pred_check_branch
      %81 = sbr.rel (%p79) target = $region45
    $region44: #{tpu_custom_call.1} parent=1 // pred_region
      %v82 = vld [vmem:[#allocation8] sm:$0x3]
      %vm83 = vcmask 254976
      %84 = vst.msk [vmem:[#allocation2] sm:$0x3] %vm83, %v82
      %v85 = vld [vmem:[%s2] sm:$0x3]
      %86 = vst.msk [vmem:[#allocation3] sm:$0x3] %vm83, %v85
    $region45: #{tpu_custom_call.1} parent=1 // pred_fallthru
      _
    %v87 = vld [vmem:[#allocation5] sm:$0xff]
    %v88 = vld [vmem:[#allocation5 + $0x8] sm:$0xff]
    %v89 = vpack.c.bf16 %v88, %v87
    %v90 = vld [vmem:[#allocation10] sm:$0xf]
    %v91 = vld [vmem:[#allocation10 + $0x4] sm:$0xf]
    %v92 = vld [vmem:[%s5] sm:$0x1]
    %v94 = vlaneseq
    %v95 = vshrl.u32 %v94, 7
    %v96 = vsub.s32 0, %v95
    %v97 = vrot.slane %v92, %v96
    %v101 = vunpack.c.l.b16 %v90
    %v102 = vunpack.c.l.b16 %v91
    %v103 = vpack.c.b16 %v102, %v101
    %vm105 = vcmask 130048
    %v107 = vsel %vm105, %v89, 0
    %109 = vmatprep.subr.bf16.mxu0 0
    %110 = vmatpush1.bf16.msra.mxu0 0
    %111 = vmatprep.subr.bf16.mxu0 0
    %112 = vmatpush1.bf16.msra.mxu0 0
    %113 = vmatprep.subr.bf16.mxu0 0
    %114 = vmatpush1.bf16.msra.mxu0 0
    %115 = vmatprep.subr.bf16.mxu0 0
    %116 = vmatpush1.bf16.msra.mxu0 0
    %117 = vmatprep.subr.bf16.mxu0 0
    %118 = vmatpush1.bf16.msra.mxu0 0
    %119 = vmatprep.subr.bf16.mxu0 0
    %120 = vmatpush1.bf16.msra.mxu0 0
    %121 = vmatprep.subr.bf16.mxu0 0
    %122 = vmatpush1.bf16.msra.mxu0 0
    %123 = vmatprep.subr.bf16.mxu0 0
    %124 = vmatpush1.bf16.msra.mxu0 %v103
    %125 = vmatprep.subr.bf16.mxu0 0
    %126 = vmatpush2.bf16.msra.mxu0 0
    %127 = vmatprep.subr.bf16.mxu0 0
    %128 = vmatpush2.bf16.msra.mxu0 0
    %129 = vmatprep.subr.bf16.mxu0 0
    %130 = vmatpush2.bf16.msra.mxu0 0
    %131 = vmatprep.subr.bf16.mxu0 0
    %132 = vmatpush2.bf16.msra.mxu0 0
    %133 = vmatprep.subr.bf16.mxu0 0
    %134 = vmatpush2.bf16.msra.mxu0 0
    %135 = vmatprep.subr.bf16.mxu0 0
    %136 = vmatpush2.bf16.msra.mxu0 0
    %137 = vmatprep.subr.bf16.mxu0 0
    %138 = vmatpush2.bf16.msra.mxu0 0
    %139 = vmatprep.subr.bf16.mxu0 0
    %140 = vmatpush2.bf16.msra.mxu0 0
    %141 = vmatprep.mubr.bf16.mxu0 0
    %142 = vmatmul.mubr.bf16.gmra.mxu0 %v107
    %v143 = vpop.f32.mrf.mxu0
    %v144 = vadd.f32 %v97, %v143
    %v145 = vpop.f32.mrf.mxu0
    %v146 = vpop.f32.mrf.mxu0
    %v147 = vadd.f32 %v97, %v146
    %v148 = vpop.f32.mrf.mxu0
    %149 = vdwg.mxu0
    %150 = vst [vmem:[#allocation4] sm:$0xff] %v144
    %151 = vst [vmem:[#allocation4 + $0x8] sm:$0xff] %v147
    %v152 = vld [vmem:[#allocation11] sm:$0xf]
    %v153 = vld [vmem:[#allocation11 + $0x4] sm:$0xf]
    %v154 = vld [vmem:[#allocation11 + $0x8] sm:$0xf]
    %v155 = vld [vmem:[#allocation11 + $0xc] sm:$0xf]
    %v156 = vld [vmem:[#allocation2] sm:$0x3]
    %v157 = vld [vmem:[#allocation3] sm:$0x3]
    %v158 = vld [vmem:[#allocation4] sm:$0x3]
    %v159 = vpack.c.bf16 %v156, %v156
    %v164 = vunpack.c.l.b16 %v152
    %v165 = vunpack.c.l.b16 %v153
    %v166 = vunpack.c.l.b16 %v154
    %v167 = vunpack.c.l.b16 %v155
    %v168 = vpack.c.b16 %v165, %v164
    %v169 = vpack.c.b16 %v167, %v166
    %vm172 = vcmask 261120
    %v174 = vsel %vm172, %v159, 0
    %176 = vmatprep.subr.bf16.mxu0 0
    %177 = vmatpush1.bf16.msra.mxu0 0
    %178 = vmatprep.subr.bf16.mxu0 0
    %179 = vmatpush1.bf16.msra.mxu0 0
    %180 = vmatprep.subr.bf16.mxu0 0
    %181 = vmatpush1.bf16.msra.mxu0 0
    %182 = vmatprep.subr.bf16.mxu0 0
    %183 = vmatpush1.bf16.msra.mxu0 0
    %184 = vmatprep.subr.bf16.mxu0 0
    %185 = vmatpush1.bf16.msra.mxu0 0
    %186 = vmatprep.subr.bf16.mxu0 0
    %187 = vmatpush1.bf16.msra.mxu0 0
    %188 = vmatprep.subr.bf16.mxu0 0
    %189 = vmatpush1.bf16.msra.mxu0 %v169
    %190 = vmatprep.subr.bf16.mxu0 0
    %191 = vmatpush1.bf16.msra.mxu0 %v168
    %192 = vmatprep.subr.bf16.mxu0 0
    %193 = vmatpush2.bf16.msra.mxu0 0
    %194 = vmatprep.subr.bf16.mxu0 0
    %195 = vmatpush2.bf16.msra.mxu0 0
    %196 = vmatprep.subr.bf16.mxu0 0
    %197 = vmatpush2.bf16.msra.mxu0 0
    %198 = vmatprep.subr.bf16.mxu0 0
    %199 = vmatpush2.bf16.msra.mxu0 0
    %200 = vmatprep.subr.bf16.mxu0 0
    %201 = vmatpush2.bf16.msra.mxu0 0
    %202 = vmatprep.subr.bf16.mxu0 0
    %203 = vmatpush2.bf16.msra.mxu0 0
    %204 = vmatprep.subr.bf16.mxu0 0
    %205 = vmatpush2.bf16.msra.mxu0 0
    %206 = vmatprep.subr.bf16.mxu0 0
    %207 = vmatpush2.bf16.msra.mxu0 0
    %208 = vmatprep.mubr.bf16.mxu0 0
    %209 = vmatmul.mubr.bf16.gmra.mxu0 %v174
    %v210 = vpop.f32.mrf.mxu0
    %v211 = vadd.f32 0.0, %v210
    %v212 = vpop.f32.mrf.mxu0
    %v213 = vpop.f32.mrf.mxu0
    %v214 = vpop.f32.mrf.mxu0
    %215 = vdwg.mxu0
    %v216 = vadd.f32 %v158, %v211
    %v217 = vxor.u32 %v216, 2147483648
    %v218 = vmul.f32 %v217, 1.442695
    %v219 = vpow.pop %v218
    %v220 = vadd.f32 %v219, 1.0
    %v221 = vrcp.pop %v220
    %v222 = vmul.f32 1.0, %v221
    %v223 = vtanh.pop %v216
    %225 = vrot.lane.b32.xlu0 %v157, 32
    %v226 = vpop.permute.xlu0 %225
    %v228 = vmul.f32 %v222, %v226
    %230 = vrot.lane.b32.xlu0 %v223, 32
    %v231 = vpop.permute.xlu0 %230
    %v233 = vmul.f32 %v222, %v231
    %235 = vrot.lane.b32.xlu0 %v233, 32
    %v236 = vpop.permute.xlu0 %235
    %v238 = vadd.f32 %v228, %v236
    %v239 = vtanh.pop %v238
    %241 = vrot.lane.b32.xlu0 %v239, 32
    %v242 = vpop.permute.xlu0 %241
    %v244 = vmul.f32 %v222, %v242
    %246 = vrot.lane.b32.xlu0 %v244, 64
    %v247 = vpop.permute.xlu0 %246
    %vm249 = vcmask 254976
    %250 = vst.msk [vmem:[#allocation13] sm:$0x3] %vm249, %v247
    %v251 = vld [vmem:[#allocation4 + $0x2] sm:$0x3]
    %v252 = vpack.c.bf16 %v244, %v244
    %254 = vrot.lane.b32.xlu0 %v252, 64
    %v255 = vpop.permute.xlu0 %254
    %v257 = vsel %vm172, %v255, 0
    %259 = vmatprep.subr.bf16.mxu0 0
    %260 = vmatpush1.bf16.msra.mxu0 0
    %261 = vmatprep.subr.bf16.mxu0 0
    %262 = vmatpush1.bf16.msra.mxu0 0
    %263 = vmatprep.subr.bf16.mxu0 0
    %264 = vmatpush1.bf16.msra.mxu0 0
    %265 = vmatprep.subr.bf16.mxu0 0
    %266 = vmatpush1.bf16.msra.mxu0 0
    %267 = vmatprep.subr.bf16.mxu0 0
    %268 = vmatpush1.bf16.msra.mxu0 0
    %269 = vmatprep.subr.bf16.mxu0 0
    %270 = vmatpush1.bf16.msra.mxu0 0
    %271 = vmatprep.subr.bf16.mxu0 0
    %272 = vmatpush1.bf16.msra.mxu0 %v169
    %273 = vmatprep.subr.bf16.mxu0 0
    %274 = vmatpush1.bf16.msra.mxu0 %v168
    %275 = vmatprep.subr.bf16.mxu0 0
    %276 = vmatpush2.bf16.msra.mxu0 0
    %277 = vmatprep.subr.bf16.mxu0 0
    %278 = vmatpush2.bf16.msra.mxu0 0
    %279 = vmatprep.subr.bf16.mxu0 0
    %280 = vmatpush2.bf16.msra.mxu0 0
    %281 = vmatprep.subr.bf16.mxu0 0
    %282 = vmatpush2.bf16.msra.mxu0 0
    %283 = vmatprep.subr.bf16.mxu0 0
    %284 = vmatpush2.bf16.msra.mxu0 0
    %285 = vmatprep.subr.bf16.mxu0 0
    %286 = vmatpush2.bf16.msra.mxu0 0
    %287 = vmatprep.subr.bf16.mxu0 0
    %288 = vmatpush2.bf16.msra.mxu0 0
    %289 = vmatprep.subr.bf16.mxu0 0
    %290 = vmatpush2.bf16.msra.mxu0 0
    %291 = vmatprep.mubr.bf16.mxu0 0
    %292 = vmatmul.mubr.bf16.gmra.mxu0 %v257
    %v293 = vpop.f32.mrf.mxu0
    %v294 = vadd.f32 0.0, %v293
    %v295 = vpop.f32.mrf.mxu0
    %v296 = vpop.f32.mrf.mxu0
    %v297 = vpop.f32.mrf.mxu0
    %298 = vdwg.mxu0
    %v299 = vadd.f32 %v251, %v294
    %v300 = vxor.u32 %v299, 2147483648
    %v301 = vmul.f32 %v300, 1.442695
    %v302 = vpow.pop %v301
    %v303 = vadd.f32 %v302, 1.0
    %v304 = vrcp.pop %v303
    %v305 = vmul.f32 1.0, %v304
    %v306 = vtanh.pop %v299
    %v307 = vmul.f32 %v305, %v238
    %309 = vrot.lane.b32.xlu0 %v306, 32
    %v310 = vpop.permute.xlu0 %309
    %v312 = vmul.f32 %v305, %v310
    %314 = vrot.lane.b32.xlu0 %v312, 32
    %v315 = vpop.permute.xlu0 %314
    %v317 = vadd.f32 %v307, %v315
    %v318 = vtanh.pop %v317
    %320 = vrot.lane.b32.xlu0 %v318, 32
    %v321 = vpop.permute.xlu0 %320
    %v323 = vmul.f32 %v305, %v321
    %325 = vrot.lane.b32.xlu0 %v323, 64
    %v326 = vpop.permute.xlu0 %325
    %328 = vst.msk [vmem:[#allocation13 + $0x2] sm:$0x3] %vm249, %v326
    %v329 = vld [vmem:[#allocation4 + $0x4] sm:$0x3]
    %v330 = vpack.c.bf16 %v323, %v323
    %332 = vrot.lane.b32.xlu0 %v330, 64
    %v333 = vpop.permute.xlu0 %332
    %v335 = vsel %vm172, %v333, 0
    %337 = vmatprep.subr.bf16.mxu0 0
    %338 = vmatpush1.bf16.msra.mxu0 0
    %339 = vmatprep.subr.bf16.mxu0 0
    %340 = vmatpush1.bf16.msra.mxu0 0
    %341 = vmatprep.subr.bf16.mxu0 0
    %342 = vmatpush1.bf16.msra.mxu0 0
    %343 = vmatprep.subr.bf16.mxu0 0
    %344 = vmatpush1.bf16.msra.mxu0 0
    %345 = vmatprep.subr.bf16.mxu0 0
    %346 = vmatpush1.bf16.msra.mxu0 0
    %347 = vmatprep.subr.bf16.mxu0 0
    %348 = vmatpush1.bf16.msra.mxu0 0
    %349 = vmatprep.subr.bf16.mxu0 0
    %350 = vmatpush1.bf16.msra.mxu0 %v169
    %351 = vmatprep.subr.bf16.mxu0 0
    %352 = vmatpush1.bf16.msra.mxu0 %v168
    %353 = vmatprep.subr.bf16.mxu0 0
    %354 = vmatpush2.bf16.msra.mxu0 0
    %355 = vmatprep.subr.bf16.mxu0 0
    %356 = vmatpush2.bf16.msra.mxu0 0
    %357 = vmatprep.subr.bf16.mxu0 0
    %358 = vmatpush2.bf16.msra.mxu0 0
    %359 = vmatprep.subr.bf16.mxu0 0
    %360 = vmatpush2.bf16.msra.mxu0 0
    %361 = vmatprep.subr.bf16.mxu0 0
    %362 = vmatpush2.bf16.msra.mxu0 0
    %363 = vmatprep.subr.bf16.mxu0 0
    %364 = vmatpush2.bf16.msra.mxu0 0
    %365 = vmatprep.subr.bf16.mxu0 0
    %366 = vmatpush2.bf16.msra.mxu0 0
    %367 = vmatprep.subr.bf16.mxu0 0
    %368 = vmatpush2.bf16.msra.mxu0 0
    %369 = vmatprep.mubr.bf16.mxu0 0
    %370 = vmatmul.mubr.bf16.gmra.mxu0 %v335
    %v371 = vpop.f32.mrf.mxu0
    %v372 = vadd.f32 0.0, %v371
    %v373 = vpop.f32.mrf.mxu0
    %v374 = vpop.f32.mrf.mxu0
    %v375 = vpop.f32.mrf.mxu0
    %376 = vdwg.mxu0
    %v377 = vadd.f32 %v329, %v372
    %v378 = vxor.u32 %v377, 2147483648
    %v379 = vmul.f32 %v378, 1.442695
    %v380 = vpow.pop %v379
    %v381 = vadd.f32 %v380, 1.0
    %v382 = vrcp.pop %v381
    %v383 = vmul.f32 1.0, %v382
    %v384 = vtanh.pop %v377
    %v385 = vmul.f32 %v383, %v317
    %387 = vrot.lane.b32.xlu0 %v384, 32
    %v388 = vpop.permute.xlu0 %387
    %v390 = vmul.f32 %v383, %v388
    %392 = vrot.lane.b32.xlu0 %v390, 32
    %v393 = vpop.permute.xlu0 %392
    %v395 = vadd.f32 %v385, %v393
    %v396 = vtanh.pop %v395
    %398 = vrot.lane.b32.xlu0 %v396, 32
    %v399 = vpop.permute.xlu0 %398
    %v401 = vmul.f32 %v383, %v399
    %403 = vrot.lane.b32.xlu0 %v401, 64
    %v404 = vpop.permute.xlu0 %403
    %406 = vst.msk [vmem:[#allocation13 + $0x4] sm:$0x3] %vm249, %v404
    %v407 = vld [vmem:[#allocation4 + $0x6] sm:$0x3]
    %v408 = vpack.c.bf16 %v401, %v401
    %410 = vrot.lane.b32.xlu0 %v408, 64
    %v411 = vpop.permute.xlu0 %410
    %v413 = vsel %vm172, %v411, 0
    %415 = vmatprep.subr.bf16.mxu0 0
    %416 = vmatpush1.bf16.msra.mxu0 0
    %417 = vmatprep.subr.bf16.mxu0 0
    %418 = vmatpush1.bf16.msra.mxu0 0
    %419 = vmatprep.subr.bf16.mxu0 0
    %420 = vmatpush1.bf16.msra.mxu0 0
    %421 = vmatprep.subr.bf16.mxu0 0
    %422 = vmatpush1.bf16.msra.mxu0 0
    %423 = vmatprep.subr.bf16.mxu0 0
    %424 = vmatpush1.bf16.msra.mxu0 0
    %425 = vmatprep.subr.bf16.mxu0 0
    %426 = vmatpush1.bf16.msra.mxu0 0
    %427 = vmatprep.subr.bf16.mxu0 0
    %428 = vmatpush1.bf16.msra.mxu0 %v169
    %429 = vmatprep.subr.bf16.mxu0 0
    %430 = vmatpush1.bf16.msra.mxu0 %v168
    %431 = vmatprep.subr.bf16.mxu0 0
    %432 = vmatpush2.bf16.msra.mxu0 0
    %433 = vmatprep.subr.bf16.mxu0 0
    %434 = vmatpush2.bf16.msra.mxu0 0
    %435 = vmatprep.subr.bf16.mxu0 0
    %436 = vmatpush2.bf16.msra.mxu0 0
    %437 = vmatprep.subr.bf16.mxu0 0
    %438 = vmatpush2.bf16.msra.mxu0 0
    %439 = vmatprep.subr.bf16.mxu0 0
    %440 = vmatpush2.bf16.msra.mxu0 0
    %441 = vmatprep.subr.bf16.mxu0 0
    %442 = vmatpush2.bf16.msra.mxu0 0
    %443 = vmatprep.subr.bf16.mxu0 0
    %444 = vmatpush2.bf16.msra.mxu0 0
    %445 = vmatprep.subr.bf16.mxu0 0
    %446 = vmatpush2.bf16.msra.mxu0 0
    %447 = vmatprep.mubr.bf16.mxu0 0
    %448 = vmatmul.mubr.bf16.gmra.mxu0 %v413
    %v449 = vpop.f32.mrf.mxu0
    %v450 = vadd.f32 0.0, %v449
    %v451 = vpop.f32.mrf.mxu0
    %v452 = vpop.f32.mrf.mxu0
    %v453 = vpop.f32.mrf.mxu0
    %454 = vdwg.mxu0
    %v455 = vadd.f32 %v407, %v450
    %v456 = vxor.u32 %v455, 2147483648
    %v457 = vmul.f32 %v456, 1.442695
    %v458 = vpow.pop %v457
    %v459 = vadd.f32 %v458, 1.0
    %v460 = vrcp.pop %v459
    %v461 = vmul.f32 1.0, %v460
    %v462 = vtanh.pop %v455
    %v463 = vmul.f32 %v461, %v395
    %465 = vrot.lane.b32.xlu0 %v462, 32
    %v466 = vpop.permute.xlu0 %465
    %v468 = vmul.f32 %v461, %v466
    %470 = vrot.lane.b32.xlu0 %v468, 32
    %v471 = vpop.permute.xlu0 %470
    %v473 = vadd.f32 %v463, %v471
    %v474 = vtanh.pop %v473
    %476 = vrot.lane.b32.xlu0 %v474, 32
    %v477 = vpop.permute.xlu0 %476
    %v479 = vmul.f32 %v461, %v477
    %481 = vrot.lane.b32.xlu0 %v479, 64
    %v482 = vpop.permute.xlu0 %481
    %484 = vst.msk [vmem:[#allocation13 + $0x6] sm:$0x3] %vm249, %v482
    %v485 = vld [vmem:[#allocation4 + $0x8] sm:$0x3]
    %v486 = vpack.c.bf16 %v479, %v479
    %488 = vrot.lane.b32.xlu0 %v486, 64
    %v489 = vpop.permute.xlu0 %488
    %v491 = vsel %vm172, %v489, 0
    %493 = vmatprep.subr.bf16.mxu0 0
    %494 = vmatpush1.bf16.msra.mxu0 0
    %495 = vmatprep.subr.bf16.mxu0 0
    %496 = vmatpush1.bf16.msra.mxu0 0
    %497 = vmatprep.subr.bf16.mxu0 0
    %498 = vmatpush1.bf16.msra.mxu0 0
    %499 = vmatprep.subr.bf16.mxu0 0
    %500 = vmatpush1.bf16.msra.mxu0 0
    %501 = vmatprep.subr.bf16.mxu0 0
    %502 = vmatpush1.bf16.msra.mxu0 0
    %503 = vmatprep.subr.bf16.mxu0 0
    %504 = vmatpush1.bf16.msra.mxu0 0
    %505 = vmatprep.subr.bf16.mxu0 0
    %506 = vmatpush1.bf16.msra.mxu0 %v169
    %507 = vmatprep.subr.bf16.mxu0 0
    %508 = vmatpush1.bf16.msra.mxu0 %v168
    %509 = vmatprep.subr.bf16.mxu0 0
    %510 = vmatpush2.bf16.msra.mxu0 0
    %511 = vmatprep.subr.bf16.mxu0 0
    %512 = vmatpush2.bf16.msra.mxu0 0
    %513 = vmatprep.subr.bf16.mxu0 0
    %514 = vmatpush2.bf16.msra.mxu0 0
    %515 = vmatprep.subr.bf16.mxu0 0
    %516 = vmatpush2.bf16.msra.mxu0 0
    %517 = vmatprep.subr.bf16.mxu0 0
    %518 = vmatpush2.bf16.msra.mxu0 0
    %519 = vmatprep.subr.bf16.mxu0 0
    %520 = vmatpush2.bf16.msra.mxu0 0
    %521 = vmatprep.subr.bf16.mxu0 0
    %522 = vmatpush2.bf16.msra.mxu0 0
    %523 = vmatprep.subr.bf16.mxu0 0
    %524 = vmatpush2.bf16.msra.mxu0 0
    %525 = vmatprep.mubr.bf16.mxu0 0
    %526 = vmatmul.mubr.bf16.gmra.mxu0 %v491
    %v527 = vpop.f32.mrf.mxu0
    %v528 = vadd.f32 0.0, %v527
    %v529 = vpop.f32.mrf.mxu0
    %v530 = vpop.f32.mrf.mxu0
    %v531 = vpop.f32.mrf.mxu0
    %532 = vdwg.mxu0
    %v533 = vadd.f32 %v485, %v528
    %v534 = vxor.u32 %v533, 2147483648
    %v535 = vmul.f32 %v534, 1.442695
    %v536 = vpow.pop %v535
    %v537 = vadd.f32 %v536, 1.0
    %v538 = vrcp.pop %v537
    %v539 = vmul.f32 1.0, %v538
    %v540 = vtanh.pop %v533
    %v541 = vmul.f32 %v539, %v473
    %543 = vrot.lane.b32.xlu0 %v540, 32
    %v544 = vpop.permute.xlu0 %543
    %v546 = vmul.f32 %v539, %v544
    %548 = vrot.lane.b32.xlu0 %v546, 32
    %v549 = vpop.permute.xlu0 %548
    %v551 = vadd.f32 %v541, %v549
    %v552 = vtanh.pop %v551
    %554 = vrot.lane.b32.xlu0 %v552, 32
    %v555 = vpop.permute.xlu0 %554
    %v557 = vmul.f32 %v539, %v555
    %559 = vrot.lane.b32.xlu0 %v557, 64
    %v560 = vpop.permute.xlu0 %559
    %562 = vst.msk [vmem:[#allocation13 + $0x8] sm:$0x3] %vm249, %v560
    %v563 = vld [vmem:[#allocation4 + $0xa] sm:$0x3]
    %v564 = vpack.c.bf16 %v557, %v557
    %566 = vrot.lane.b32.xlu0 %v564, 64
    %v567 = vpop.permute.xlu0 %566
    %v569 = vsel %vm172, %v567, 0
    %571 = vmatprep.subr.bf16.mxu0 0
    %572 = vmatpush1.bf16.msra.mxu0 0
    %573 = vmatprep.subr.bf16.mxu0 0
    %574 = vmatpush1.bf16.msra.mxu0 0
    %575 = vmatprep.subr.bf16.mxu0 0
    %576 = vmatpush1.bf16.msra.mxu0 0
    %577 = vmatprep.subr.bf16.mxu0 0
    %578 = vmatpush1.bf16.msra.mxu0 0
    %579 = vmatprep.subr.bf16.mxu0 0
    %580 = vmatpush1.bf16.msra.mxu0 0
    %581 = vmatprep.subr.bf16.mxu0 0
    %582 = vmatpush1.bf16.msra.mxu0 0
    %583 = vmatprep.subr.bf16.mxu0 0
    %584 = vmatpush1.bf16.msra.mxu0 %v169
    %585 = vmatprep.subr.bf16.mxu0 0
    %586 = vmatpush1.bf16.msra.mxu0 %v168
    %587 = vmatprep.subr.bf16.mxu0 0
    %588 = vmatpush2.bf16.msra.mxu0 0
    %589 = vmatprep.subr.bf16.mxu0 0
    %590 = vmatpush2.bf16.msra.mxu0 0
    %591 = vmatprep.subr.bf16.mxu0 0
    %592 = vmatpush2.bf16.msra.mxu0 0
    %593 = vmatprep.subr.bf16.mxu0 0
    %594 = vmatpush2.bf16.msra.mxu0 0
    %595 = vmatprep.subr.bf16.mxu0 0
    %596 = vmatpush2.bf16.msra.mxu0 0
    %597 = vmatprep.subr.bf16.mxu0 0
    %598 = vmatpush2.bf16.msra.mxu0 0
    %599 = vmatprep.subr.bf16.mxu0 0
    %600 = vmatpush2.bf16.msra.mxu0 0
    %601 = vmatprep.subr.bf16.mxu0 0
    %602 = vmatpush2.bf16.msra.mxu0 0
    %603 = vmatprep.mubr.bf16.mxu0 0
    %604 = vmatmul.mubr.bf16.gmra.mxu0 %v569
    %v605 = vpop.f32.mrf.mxu0
    %v606 = vadd.f32 0.0, %v605
    %v607 = vpop.f32.mrf.mxu0
    %v608 = vpop.f32.mrf.mxu0
    %v609 = vpop.f32.mrf.mxu0
    %610 = vdwg.mxu0
    %v611 = vadd.f32 %v563, %v606
    %v612 = vxor.u32 %v611, 2147483648
    %v613 = vmul.f32 %v612, 1.442695
    %v614 = vpow.pop %v613
    %v615 = vadd.f32 %v614, 1.0
    %v616 = vrcp.pop %v615
    %v617 = vmul.f32 1.0, %v616
    %v618 = vtanh.pop %v611
    %v619 = vmul.f32 %v617, %v551
    %621 = vrot.lane.b32.xlu0 %v618, 32
    %v622 = vpop.permute.xlu0 %621
    %v624 = vmul.f32 %v617, %v622
    %626 = vrot.lane.b32.xlu0 %v624, 32
    %v627 = vpop.permute.xlu0 %626
    %v629 = vadd.f32 %v619, %v627
    %v630 = vtanh.pop %v629
    %632 = vrot.lane.b32.xlu0 %v630, 32
    %v633 = vpop.permute.xlu0 %632
    %v635 = vmul.f32 %v617, %v633
    %637 = vrot.lane.b32.xlu0 %v635, 64
    %v638 = vpop.permute.xlu0 %637
    %640 = vst.msk [vmem:[#allocation13 + $0xa] sm:$0x3] %vm249, %v638
    %v641 = vld [vmem:[#allocation4 + $0xc] sm:$0x3]
    %v642 = vpack.c.bf16 %v635, %v635
    %644 = vrot.lane.b32.xlu0 %v642, 64
    %v645 = vpop.permute.xlu0 %644
    %v647 = vsel %vm172, %v645, 0
    %649 = vmatprep.subr.bf16.mxu0 0
    %650 = vmatpush1.bf16.msra.mxu0 0
    %651 = vmatprep.subr.bf16.mxu0 0
    %652 = vmatpush1.bf16.msra.mxu0 0
    %653 = vmatprep.subr.bf16.mxu0 0
    %654 = vmatpush1.bf16.msra.mxu0 0
    %655 = vmatprep.subr.bf16.mxu0 0
    %656 = vmatpush1.bf16.msra.mxu0 0
    %657 = vmatprep.subr.bf16.mxu0 0
    %658 = vmatpush1.bf16.msra.mxu0 0
    %659 = vmatprep.subr.bf16.mxu0 0
    %660 = vmatpush1.bf16.msra.mxu0 0
    %661 = vmatprep.subr.bf16.mxu0 0
    %662 = vmatpush1.bf16.msra.mxu0 %v169
    %663 = vmatprep.subr.bf16.mxu0 0
    %664 = vmatpush1.bf16.msra.mxu0 %v168
    %665 = vmatprep.subr.bf16.mxu0 0
    %666 = vmatpush2.bf16.msra.mxu0 0
    %667 = vmatprep.subr.bf16.mxu0 0
    %668 = vmatpush2.bf16.msra.mxu0 0
    %669 = vmatprep.subr.bf16.mxu0 0
    %670 = vmatpush2.bf16.msra.mxu0 0
    %671 = vmatprep.subr.bf16.mxu0 0
    %672 = vmatpush2.bf16.msra.mxu0 0
    %673 = vmatprep.subr.bf16.mxu0 0
    %674 = vmatpush2.bf16.msra.mxu0 0
    %675 = vmatprep.subr.bf16.mxu0 0
    %676 = vmatpush2.bf16.msra.mxu0 0
    %677 = vmatprep.subr.bf16.mxu0 0
    %678 = vmatpush2.bf16.msra.mxu0 0
    %679 = vmatprep.subr.bf16.mxu0 0
    %680 = vmatpush2.bf16.msra.mxu0 0
    %681 = vmatprep.mubr.bf16.mxu0 0
    %682 = vmatmul.mubr.bf16.gmra.mxu0 %v647
    %v683 = vpop.f32.mrf.mxu0
    %v684 = vadd.f32 0.0, %v683
    %v685 = vpop.f32.mrf.mxu0
    %v686 = vpop.f32.mrf.mxu0
    %v687 = vpop.f32.mrf.mxu0
    %688 = vdwg.mxu0
    %v689 = vadd.f32 %v641, %v684
    %v690 = vxor.u32 %v689, 2147483648
    %v691 = vmul.f32 %v690, 1.442695
    %v692 = vpow.pop %v691
    %v693 = vadd.f32 %v692, 1.0
    %v694 = vrcp.pop %v693
    %v695 = vmul.f32 1.0, %v694
    %v696 = vtanh.pop %v689
    %v697 = vmul.f32 %v695, %v629
    %699 = vrot.lane.b32.xlu0 %v696, 32
    %v700 = vpop.permute.xlu0 %699
    %v702 = vmul.f32 %v695, %v700
    %704 = vrot.lane.b32.xlu0 %v702, 32
    %v705 = vpop.permute.xlu0 %704
    %v707 = vadd.f32 %v697, %v705
    %v708 = vtanh.pop %v707
    %710 = vrot.lane.b32.xlu0 %v708, 32
    %v711 = vpop.permute.xlu0 %710
    %v713 = vmul.f32 %v695, %v711
    %715 = vrot.lane.b32.xlu0 %v713, 64
    %v716 = vpop.permute.xlu0 %715
    %718 = vst.msk [vmem:[#allocation13 + $0xc] sm:$0x3] %vm249, %v716
    %v719 = vld [vmem:[#allocation4 + $0xe] sm:$0x3]
    %v720 = vpack.c.bf16 %v713, %v713
    %722 = vrot.lane.b32.xlu0 %v720, 64
    %v723 = vpop.permute.xlu0 %722
    %v725 = vsel %vm172, %v723, 0
    %727 = vmatprep.subr.bf16.mxu0 0
    %728 = vmatpush1.bf16.msra.mxu0 0
    %729 = vmatprep.subr.bf16.mxu0 0
    %730 = vmatpush1.bf16.msra.mxu0 0
    %731 = vmatprep.subr.bf16.mxu0 0
    %732 = vmatpush1.bf16.msra.mxu0 0
    %733 = vmatprep.subr.bf16.mxu0 0
    %734 = vmatpush1.bf16.msra.mxu0 0
    %735 = vmatprep.subr.bf16.mxu0 0
    %736 = vmatpush1.bf16.msra.mxu0 0
    %737 = vmatprep.subr.bf16.mxu0 0
    %738 = vmatpush1.bf16.msra.mxu0 0
    %739 = vmatprep.subr.bf16.mxu0 0
    %740 = vmatpush1.bf16.msra.mxu0 %v169
    %741 = vmatprep.subr.bf16.mxu0 0
    %742 = vmatpush1.bf16.msra.mxu0 %v168
    %743 = vmatprep.subr.bf16.mxu0 0
    %744 = vmatpush2.bf16.msra.mxu0 0
    %745 = vmatprep.subr.bf16.mxu0 0
    %746 = vmatpush2.bf16.msra.mxu0 0
    %747 = vmatprep.subr.bf16.mxu0 0
    %748 = vmatpush2.bf16.msra.mxu0 0
    %749 = vmatprep.subr.bf16.mxu0 0
    %750 = vmatpush2.bf16.msra.mxu0 0
    %751 = vmatprep.subr.bf16.mxu0 0
    %752 = vmatpush2.bf16.msra.mxu0 0
    %753 = vmatprep.subr.bf16.mxu0 0
    %754 = vmatpush2.bf16.msra.mxu0 0
    %755 = vmatprep.subr.bf16.mxu0 0
    %756 = vmatpush2.bf16.msra.mxu0 0
    %757 = vmatprep.subr.bf16.mxu0 0
    %758 = vmatpush2.bf16.msra.mxu0 0
    %759 = vmatprep.mubr.bf16.mxu0 0
    %760 = vmatmul.mubr.bf16.gmra.mxu0 %v725
    %v761 = vpop.f32.mrf.mxu0
    %v762 = vadd.f32 0.0, %v761
    %v763 = vpop.f32.mrf.mxu0
    %v764 = vpop.f32.mrf.mxu0
    %v765 = vpop.f32.mrf.mxu0
    %766 = vdwg.mxu0
    %v767 = vadd.f32 %v719, %v762
    %v768 = vxor.u32 %v767, 2147483648
    %v769 = vmul.f32 %v768, 1.442695
    %v770 = vpow.pop %v769
    %v771 = vadd.f32 %v770, 1.0
    %v772 = vrcp.pop %v771
    %v773 = vmul.f32 1.0, %v772
    %v774 = vtanh.pop %v767
    %v775 = vmul.f32 %v773, %v707
    %777 = vrot.lane.b32.xlu0 %v774, 32
    %v778 = vpop.permute.xlu0 %777
    %v780 = vmul.f32 %v773, %v778
    %782 = vrot.lane.b32.xlu0 %v780, 32
    %v783 = vpop.permute.xlu0 %782
    %v785 = vadd.f32 %v775, %v783
    %v786 = vtanh.pop %v785
    %788 = vrot.lane.b32.xlu0 %v786, 32
    %v789 = vpop.permute.xlu0 %788
    %v791 = vmul.f32 %v773, %v789
    %793 = vrot.lane.b32.xlu0 %v791, 64
    %v794 = vpop.permute.xlu0 %793
    %796 = vst.msk [vmem:[#allocation13 + $0xe] sm:$0x3] %vm249, %v794
    %797 = vst.msk [vmem:[#allocation2] sm:$0x3] %vm249, %v794
    %799 = vrot.lane.b32.xlu0 %v785, 96
    %v800 = vpop.permute.xlu0 %799
    %802 = vst.msk [vmem:[#allocation3] sm:$0x3] %vm249, %v800
    // Predicated region
    $region46: #{tpu_custom_call.1} parent=1 // pred_check
      _
    $region47: #{tpu_custom_call.1} parent=1 // pred_check_branch
      %804 = sbr.rel (0) target = $region49
    $region48: #{tpu_custom_call.1} parent=1 // pred_region
      %s806 = ssub.s32 256, 256
      %807 = vsyncadd [#allocation7], %s806
      %s808 = sshll.u32 [#allocation13], 4
      %s809 = int_to_ptr.vmem [resolvable:$true] %s808
      %814 = dma.vmem_to_hbm [thread:$0]  %s809, 256, %s6, [#allocation7], 128, 128, 8
    $region49: #{tpu_custom_call.1} parent=1 // pred_fallthru
      _
    // Predicated region
    $region50: #{tpu_custom_call.1} parent=1 // pred_check
      _
    $region51: #{tpu_custom_call.1} parent=1 // pred_check_branch
      %816 = sbr.rel (0) target = $region53
    $region52: #{tpu_custom_call.1} parent=1 // pred_region
      %817 = dma.done [#allocation7], 256
    $region53: #{tpu_custom_call.1} parent=1 // pred_fallthru
      _
    %818 = vsyncpa [#allocation6], 1
    %819 = vsyncpa [#allocation9], 1
    %820 = vsyncpa [#allocation12], 1
    %821 = vsyncpa [#allocation7], 1

</llo_original>
